<compile_context>
chip_gen: v5e
topology: v5e:2x2
jax: 0.10.0
libtpu: 0.0.40
codegen_flags: <defaults>
</compile_context>

<pallas_src>
import jax
import jax.numpy as jnp
from jax.experimental import pallas as pl
from jax.experimental.pallas import tpu as pltpu

LN_EPS = 1e-5


def _round_up(x, m):
    return ((x + m - 1) // m) * m


def actor_discrete_kernel(state_ref, gamma_ref, beta_ref,
                          w1_ref, b1_ref, w2_ref, b2_ref,
                          w3_ref, b3_ref, w4_ref, b4_ref,
                          out_ref):
    x = state_ref[...].astype(jnp.float32)                      # (TB, obs)

    # --- LayerNorm(observations): biased variance, eps=1e-5, affine ---
    mean = jnp.mean(x, axis=-1, keepdims=True)
    var = jnp.mean((x - mean) ** 2, axis=-1, keepdims=True)
    x = (x - mean) * jax.lax.rsqrt(var + LN_EPS)
    x = x * gamma_ref[...] + beta_ref[...]

    # --- tanh ---
    x = jnp.tanh(x)

    # --- layer_1: obs -> 256, relu (bf16 MXU operands, f32 accumulate) ---
    h = jnp.dot(x.astype(jnp.bfloat16), w1_ref[...],
                preferred_element_type=jnp.float32) + b1_ref[...]
    h = jnp.maximum(h, 0.0)

    # --- layer_2: 256 -> 256, relu ---
    h = jnp.dot(h.astype(jnp.bfloat16), w2_ref[...],
                preferred_element_type=jnp.float32) + b2_ref[...]
    h = jnp.maximum(h, 0.0)

    # --- layer_3: 256 -> 128, relu ---
    h = jnp.dot(h.astype(jnp.bfloat16), w3_ref[...],
                preferred_element_type=jnp.float32) + b3_ref[...]
    h = jnp.maximum(h, 0.0)

    # --- output: 128 -> actions_padded, softmax(dim=-1) ---
    # Padded action columns carry bias -1e30 -> exp(...) underflows to 0,
    # so the softmax over the real columns is unchanged.
    logits = jnp.dot(h.astype(jnp.bfloat16), w4_ref[...],
                     preferred_element_type=jnp.float32) + b4_ref[...]
    m = jnp.max(logits, axis=-1, keepdims=True)
    e = jnp.exp(logits - m)
    inv = pl.reciprocal(jnp.sum(e, axis=-1, keepdims=True), approx=True)
    out_ref[...] = (e * inv).astype(out_ref.dtype)


def actor_discrete_forward(state, params, *, block_b=256):
    """state: (B, observations) f32 -> (B, actions) f32 probabilities."""
    B, obs = state.shape
    actions = params["w4"].shape[1]

    # ---- batch tile: multiple of 8 (sublane), capped at block_b ----
    TB = min(block_b, _round_up(B, 8))
    B_pad = _round_up(B, TB)
    state_p = state if B_pad == B else jnp.pad(state, ((0, B_pad - B), (0, 0)))

    # ---- lane-dense output: pad actions up to a multiple of 128 ----
    A_pad = _round_up(actions, 128)
    w4 = params["w4"]
    b4 = params["b4"]
    if A_pad != actions:
        w4 = jnp.pad(w4, ((0, 0), (0, A_pad - actions)))
        b4 = jnp.pad(b4, ((0, 0), (0, A_pad - actions)), constant_values=-1e30)

    # ---- weights to bf16 (matmul operands); biases / LN affine stay f32 ----
    w1 = params["w1"].astype(jnp.bfloat16)
    w2 = params["w2"].astype(jnp.bfloat16)
    w3 = params["w3"].astype(jnp.bfloat16)
    w4 = w4.astype(jnp.bfloat16)

    hid1, hid2, hid3 = w1.shape[1], w2.shape[1], w3.shape[1]

    grid = (B_pad // TB,)

    # Streamed (batch) blocks.
    state_spec = pl.BlockSpec((TB, obs), lambda i: (i, 0))
    out_spec = pl.BlockSpec((TB, A_pad), lambda i: (i, 0))

    # Resident (constant block index across the grid -> fetched once).
    def const(shape):
        return pl.BlockSpec(shape, lambda i: (0, 0))

    in_specs = [
        state_spec,
        const((1, obs)), const((1, obs)),           # gamma, beta
        const((obs, hid1)), const((1, hid1)),       # w1, b1
        const((hid1, hid2)), const((1, hid2)),      # w2, b2
        const((hid2, hid3)), const((1, hid3)),      # w3, b3
        const((hid3, A_pad)), const((1, A_pad)),    # w4, b4
    ]

    out_p = pl.pallas_call(
        actor_discrete_kernel,
        out_shape=jax.ShapeDtypeStruct((B_pad, A_pad), jnp.float32),
        grid=grid,
        in_specs=in_specs,
        out_specs=out_spec,
        compiler_params=pltpu.CompilerParams(
            dimension_semantics=("parallel",)),     # megacore-shard batch on v7x
    )(state_p,
      params["gamma"], params["beta"],
      w1, params["b1"], w2, params["b2"],
      w3, params["b3"], w4, b4)

    return out_p[:B, :actions]


def init_params(key, observations, actions):
    """Deterministic synthetic init mirroring the module's shapes/init ranges."""
    ks = jax.random.split(key, 8)

    def uni(k, shape, lim):
        return jax.random.uniform(k, shape, jnp.float32, minval=-lim, maxval=lim)

    # LayerNorm affine: PyTorch default gamma=1, beta=0.
    gamma = jnp.ones((1, observations), jnp.float32)
    beta = jnp.zeros((1, observations), jnp.float32)

    # Linear weights: uniform(-0.003, 0.003) as in the module's __init__.
    # Biases: PyTorch default uniform(-1/sqrt(fan_in), 1/sqrt(fan_in)).
    w1 = uni(ks[0], (observations, 256), 0.003)
    b1 = uni(ks[1], (1, 256), 1.0 / (observations ** 0.5))
    w2 = uni(ks[2], (256, 256), 0.003)
    b2 = uni(ks[3], (1, 256), 1.0 / (256 ** 0.5))
    w3 = uni(ks[4], (256, 128), 0.003)
    b3 = uni(ks[5], (1, 128), 1.0 / (256 ** 0.5))
    w4 = uni(ks[6], (128, actions), 0.003)
    b4 = uni(ks[7], (1, actions), 1.0 / (128 ** 0.5))

    return dict(gamma=gamma, beta=beta, w1=w1, b1=b1, w2=w2, b2=b2,
                w3=w3, b3=b3, w4=w4, b4=b4)


def actor_discrete_ref(state, p):
    """Pure-JAX f32 reference for validation."""
    x = state.astype(jnp.float32)
    mean = jnp.mean(x, axis=-1, keepdims=True)
    var = jnp.mean((x - mean) ** 2, axis=-1, keepdims=True)
    x = (x - mean) / jnp.sqrt(var + LN_EPS) * p["gamma"] + p["beta"]
    x = jnp.tanh(x)
    x = jax.nn.relu(x @ p["w1"] + p["b1"])
    x = jax.nn.relu(x @ p["w2"] + p["b2"])
    x = jax.nn.relu(x @ p["w3"] + p["b3"])
    return jax.nn.softmax(x @ p["w4"] + p["b4"], axis=-1)


if __name__ == "__main__":
    observations = 32   # small example observation dim
    actions = 8         # small example action dim
    batch = 8

    key = jax.random.PRNGKey(0)
    k_state, k_params = jax.random.split(key)

    state = jax.random.normal(k_state, (batch, observations), jnp.float32)
    params = init_params(k_params, observations, actions)

    probs = actor_discrete_forward(state, params)
    probs = jax.block_until_ready(probs)

    ref = actor_discrete_ref(state, params)
    assert probs.shape == (batch, actions)
    # approx reciprocal -> ~2^-12 relative error on the normalization.
    assert jnp.allclose(jnp.sum(probs, axis=-1), 1.0, atol=1e-3)
    # bf16 matmul operands (f32 accumulate) vs. f32 reference.
    assert jnp.allclose(probs, ref, atol=5e-3, rtol=5e-2)

    print("KERNEL_OK")
</pallas_src>

<mosaic_0001>
module attributes {stable_mosaic.version = 11 : i64} {
  func.func @actor_discrete_kernel(%arg0: i32, %arg1: memref<8x32xf32, #tpu.memory_space<vmem>>, %arg2: memref<1x32xf32, #tpu.memory_space<vmem>>, %arg3: memref<1x32xf32, #tpu.memory_space<vmem>>, %arg4: memref<32x256xbf16, #tpu.memory_space<vmem>>, %arg5: memref<1x256xf32, #tpu.memory_space<vmem>>, %arg6: memref<256x256xbf16, #tpu.memory_space<vmem>>, %arg7: memref<1x256xf32, #tpu.memory_space<vmem>>, %arg8: memref<256x128xbf16, #tpu.memory_space<vmem>>, %arg9: memref<1x128xf32, #tpu.memory_space<vmem>>, %arg10: memref<128x128xbf16, #tpu.memory_space<vmem>>, %arg11: memref<1x128xf32, #tpu.memory_space<vmem>>, %arg12: memref<8x128xf32, #tpu.memory_space<vmem>>) attributes {dimension_semantics = [#tpu.dimension_semantics<parallel>], iteration_bounds = array<i64: 1>, scalar_prefetch = 0 : i64, scratch_operands = 0 : i64, tpu.core_type = #tpu.core_type<tc>, window_params = [{transform_indices = @transform_0, window_bounds = array<i64: 8, 32>}, {pipeline_mode = #tpu.pipeline_mode<synchronous>, transform_indices = @transform_1, window_bounds = array<i64: 1, 32>}, {pipeline_mode = #tpu.pipeline_mode<synchronous>, transform_indices = @transform_2, window_bounds = array<i64: 1, 32>}, {pipeline_mode = #tpu.pipeline_mode<synchronous>, transform_indices = @transform_3, window_bounds = array<i64: 32, 256>}, {pipeline_mode = #tpu.pipeline_mode<synchronous>, transform_indices = @transform_4, window_bounds = array<i64: 1, 256>}, {pipeline_mode = #tpu.pipeline_mode<synchronous>, transform_indices = @transform_5, window_bounds = array<i64: 256, 256>}, {pipeline_mode = #tpu.pipeline_mode<synchronous>, transform_indices = @transform_6, window_bounds = array<i64: 1, 256>}, {pipeline_mode = #tpu.pipeline_mode<synchronous>, transform_indices = @transform_7, window_bounds = array<i64: 256, 128>}, {pipeline_mode = #tpu.pipeline_mode<synchronous>, transform_indices = @transform_8, window_bounds = array<i64: 1, 128>}, {pipeline_mode = #tpu.pipeline_mode<synchronous>, transform_indices = @transform_9, window_bounds = array<i64: 128, 128>}, {pipeline_mode = #tpu.pipeline_mode<synchronous>, transform_indices = @transform_10, window_bounds = array<i64: 1, 128>}, {transform_indices = @transform_11, window_bounds = array<i64: 8, 128>}]} {
    %c0 = arith.constant 0 : index
    %c0_0 = arith.constant 0 : index
    %0 = vector.load %arg1[%c0, %c0_0] : memref<8x32xf32, #tpu.memory_space<vmem>>, vector<8x32xf32>
    %cst = arith.constant dense<0.000000e+00> : vector<8xf32>
    %1 = vector.multi_reduction <add>, %0, %cst [1] : vector<8x32xf32> to vector<8xf32>
    %2 = vector.shape_cast %1 : vector<8xf32> to vector<8x1xf32>
    %cst_1 = arith.constant 3.200000e+01 : f32
    %3 = vector.broadcast %cst_1 : f32 to vector<8x1xf32>
    %4 = arith.divf %2, %3 : vector<8x1xf32>
    %5 = vector.broadcast %4 : vector<8x1xf32> to vector<8x32xf32>
    %6 = arith.subf %0, %5 : vector<8x32xf32>
    %7 = arith.mulf %6, %6 : vector<8x32xf32>
    %cst_2 = arith.constant dense<0.000000e+00> : vector<8xf32>
    %8 = vector.multi_reduction <add>, %7, %cst_2 [1] : vector<8x32xf32> to vector<8xf32>
    %9 = vector.shape_cast %8 : vector<8xf32> to vector<8x1xf32>
    %cst_3 = arith.constant 3.200000e+01 : f32
    %10 = vector.broadcast %cst_3 : f32 to vector<8x1xf32>
    %11 = arith.divf %9, %10 : vector<8x1xf32>
    %12 = vector.broadcast %4 : vector<8x1xf32> to vector<8x32xf32>
    %13 = arith.subf %0, %12 : vector<8x32xf32>
    %cst_4 = arith.constant 9.99999974E-6 : f32
    %14 = vector.broadcast %cst_4 : f32 to vector<8x1xf32>
    %15 = arith.addf %11, %14 : vector<8x1xf32>
    %16 = math.rsqrt %15 : vector<8x1xf32>
    %17 = vector.broadcast %16 : vector<8x1xf32> to vector<8x32xf32>
    %18 = arith.mulf %13, %17 : vector<8x32xf32>
    %c0_5 = arith.constant 0 : index
    %c0_6 = arith.constant 0 : index
    %19 = vector.load %arg2[%c0_5, %c0_6] : memref<1x32xf32, #tpu.memory_space<vmem>>, vector<1x32xf32>
    %20 = vector.broadcast %19 : vector<1x32xf32> to vector<8x32xf32>
    %21 = arith.mulf %18, %20 : vector<8x32xf32>
    %c0_7 = arith.constant 0 : index
    %c0_8 = arith.constant 0 : index
    %22 = vector.load %arg3[%c0_7, %c0_8] : memref<1x32xf32, #tpu.memory_space<vmem>>, vector<1x32xf32>
    %23 = vector.broadcast %22 : vector<1x32xf32> to vector<8x32xf32>
    %24 = arith.addf %21, %23 : vector<8x32xf32>
    %25 = math.tanh %24 : vector<8x32xf32>
    %26 = arith.truncf %25 : vector<8x32xf32> to vector<8x32xbf16>
    %c0_9 = arith.constant 0 : index
    %c0_10 = arith.constant 0 : index
    %27 = vector.load %arg4[%c0_9, %c0_10] : memref<32x256xbf16, #tpu.memory_space<vmem>>, vector<32x256xbf16>
    %cst_11 = arith.constant dense<0.000000e+00> : vector<8x256xf32>
    %28 = tpu.matmul %26, %27, %cst_11 {dimension_numbers = #tpu.dot_dimension_numbers<[1], [0], [0], [1], [0, 0, 1, 1], [], []>} : vector<8x32xbf16>, vector<32x256xbf16>, vector<8x256xf32> -> vector<8x256xf32>
    %c0_12 = arith.constant 0 : index
    %c0_13 = arith.constant 0 : index
    %29 = vector.load %arg5[%c0_12, %c0_13] : memref<1x256xf32, #tpu.memory_space<vmem>>, vector<1x256xf32>
    %30 = vector.broadcast %29 : vector<1x256xf32> to vector<8x256xf32>
    %31 = arith.addf %28, %30 : vector<8x256xf32>
    %cst_14 = arith.constant 0.000000e+00 : f32
    %32 = vector.broadcast %cst_14 : f32 to vector<8x256xf32>
    %33 = arith.maximumf %31, %32 : vector<8x256xf32>
    %34 = arith.truncf %33 : vector<8x256xf32> to vector<8x256xbf16>
    %c0_15 = arith.constant 0 : index
    %c0_16 = arith.constant 0 : index
    %35 = vector.load %arg6[%c0_15, %c0_16] : memref<256x256xbf16, #tpu.memory_space<vmem>>, vector<256x256xbf16>
    %cst_17 = arith.constant dense<0.000000e+00> : vector<8x256xf32>
    %36 = tpu.matmul %34, %35, %cst_17 {dimension_numbers = #tpu.dot_dimension_numbers<[1], [0], [0], [1], [0, 0, 1, 1], [], []>} : vector<8x256xbf16>, vector<256x256xbf16>, vector<8x256xf32> -> vector<8x256xf32>
    %c0_18 = arith.constant 0 : index
    %c0_19 = arith.constant 0 : index
    %37 = vector.load %arg7[%c0_18, %c0_19] : memref<1x256xf32, #tpu.memory_space<vmem>>, vector<1x256xf32>
    %38 = vector.broadcast %37 : vector<1x256xf32> to vector<8x256xf32>
    %39 = arith.addf %36, %38 : vector<8x256xf32>
    %cst_20 = arith.constant 0.000000e+00 : f32
    %40 = vector.broadcast %cst_20 : f32 to vector<8x256xf32>
    %41 = arith.maximumf %39, %40 : vector<8x256xf32>
    %42 = arith.truncf %41 : vector<8x256xf32> to vector<8x256xbf16>
    %c0_21 = arith.constant 0 : index
    %c0_22 = arith.constant 0 : index
    %43 = vector.load %arg8[%c0_21, %c0_22] : memref<256x128xbf16, #tpu.memory_space<vmem>>, vector<256x128xbf16>
    %cst_23 = arith.constant dense<0.000000e+00> : vector<8x128xf32>
    %44 = tpu.matmul %42, %43, %cst_23 {dimension_numbers = #tpu.dot_dimension_numbers<[1], [0], [0], [1], [0, 0, 1, 1], [], []>} : vector<8x256xbf16>, vector<256x128xbf16>, vector<8x128xf32> -> vector<8x128xf32>
    %c0_24 = arith.constant 0 : index
    %c0_25 = arith.constant 0 : index
    %45 = vector.load %arg9[%c0_24, %c0_25] : memref<1x128xf32, #tpu.memory_space<vmem>>, vector<1x128xf32>
    %46 = vector.broadcast %45 : vector<1x128xf32> to vector<8x128xf32>
    %47 = arith.addf %44, %46 : vector<8x128xf32>
    %cst_26 = arith.constant 0.000000e+00 : f32
    %48 = vector.broadcast %cst_26 : f32 to vector<8x128xf32>
    %49 = arith.maximumf %47, %48 : vector<8x128xf32>
    %50 = arith.truncf %49 : vector<8x128xf32> to vector<8x128xbf16>
    %c0_27 = arith.constant 0 : index
    %c0_28 = arith.constant 0 : index
    %51 = vector.load %arg10[%c0_27, %c0_28] : memref<128x128xbf16, #tpu.memory_space<vmem>>, vector<128x128xbf16>
    %cst_29 = arith.constant dense<0.000000e+00> : vector<8x128xf32>
    %52 = tpu.matmul %50, %51, %cst_29 {dimension_numbers = #tpu.dot_dimension_numbers<[1], [0], [0], [1], [0, 0, 1, 1], [], []>} : vector<8x128xbf16>, vector<128x128xbf16>, vector<8x128xf32> -> vector<8x128xf32>
    %c0_30 = arith.constant 0 : index
    %c0_31 = arith.constant 0 : index
    %53 = vector.load %arg11[%c0_30, %c0_31] : memref<1x128xf32, #tpu.memory_space<vmem>>, vector<1x128xf32>
    %54 = vector.broadcast %53 : vector<1x128xf32> to vector<8x128xf32>
    %55 = arith.addf %52, %54 : vector<8x128xf32>
    %cst_32 = arith.constant dense<0xFF800000> : vector<8xf32>
    %56 = vector.multi_reduction <maximumf>, %55, %cst_32 [1] : vector<8x128xf32> to vector<8xf32>
    %57 = vector.shape_cast %56 : vector<8xf32> to vector<8x1xf32>
    %58 = vector.broadcast %57 : vector<8x1xf32> to vector<8x128xf32>
    %59 = arith.subf %55, %58 : vector<8x128xf32>
    %60 = math.exp %59 : vector<8x128xf32>
    %cst_33 = arith.constant dense<0.000000e+00> : vector<8xf32>
    %61 = vector.multi_reduction <add>, %60, %cst_33 [1] : vector<8x128xf32> to vector<8xf32>
    %62 = vector.shape_cast %61 : vector<8xf32> to vector<8x1xf32>
    %63 = tpu.reciprocal %62 {approx = true} : vector<8x1xf32> -> vector<8x1xf32>
    %64 = vector.broadcast %63 : vector<8x1xf32> to vector<8x128xf32>
    %65 = arith.mulf %60, %64 : vector<8x128xf32>
    %c0_34 = arith.constant 0 : index
    %c0_35 = arith.constant 0 : index
    %66 = vector.load %arg12[%c0_34, %c0_35] : memref<8x128xf32, #tpu.memory_space<vmem>>, vector<8x128xf32>
    tpu.vector_store %arg12[%c0_34, %c0_35], %65 {strides = array<i32>} : memref<8x128xf32, #tpu.memory_space<vmem>>, vector<8x128xf32>,
    return
  }
  func.func @transform_0(%arg0: i32) -> (i32, i32) {
    %c0_i32 = arith.constant 0 : i32
    %c0_i32_0 = arith.constant 0 : i32
    return %arg0, %c0_i32 : i32, i32
  }
  func.func @transform_1(%arg0: i32) -> (i32, i32) {
    %c0_i32 = arith.constant 0 : i32
    %c0_i32_0 = arith.constant 0 : i32
    %c0_i32_1 = arith.constant 0 : i32
    return %c0_i32, %c0_i32_0 : i32, i32
  }
  func.func @transform_2(%arg0: i32) -> (i32, i32) {
    %c0_i32 = arith.constant 0 : i32
    %c0_i32_0 = arith.constant 0 : i32
    %c0_i32_1 = arith.constant 0 : i32
    return %c0_i32, %c0_i32_0 : i32, i32
  }
  func.func @transform_3(%arg0: i32) -> (i32, i32) {
    %c0_i32 = arith.constant 0 : i32
    %c0_i32_0 = arith.constant 0 : i32
    %c0_i32_1 = arith.constant 0 : i32
    return %c0_i32, %c0_i32_0 : i32, i32
  }
  func.func @transform_4(%arg0: i32) -> (i32, i32) {
    %c0_i32 = arith.constant 0 : i32
    %c0_i32_0 = arith.constant 0 : i32
    %c0_i32_1 = arith.constant 0 : i32
    return %c0_i32, %c0_i32_0 : i32, i32
  }
  func.func @transform_5(%arg0: i32) -> (i32, i32) {
    %c0_i32 = arith.constant 0 : i32
    %c0_i32_0 = arith.constant 0 : i32
    %c0_i32_1 = arith.constant 0 : i32
    return %c0_i32, %c0_i32_0 : i32, i32
  }
  func.func @transform_6(%arg0: i32) -> (i32, i32) {
    %c0_i32 = arith.constant 0 : i32
    %c0_i32_0 = arith.constant 0 : i32
    %c0_i32_1 = arith.constant 0 : i32
    return %c0_i32, %c0_i32_0 : i32, i32
  }
  func.func @transform_7(%arg0: i32) -> (i32, i32) {
    %c0_i32 = arith.constant 0 : i32
    %c0_i32_0 = arith.constant 0 : i32
    %c0_i32_1 = arith.constant 0 : i32
    return %c0_i32, %c0_i32_0 : i32, i32
  }
  func.func @transform_8(%arg0: i32) -> (i32, i32) {
    %c0_i32 = arith.constant 0 : i32
    %c0_i32_0 = arith.constant 0 : i32
    %c0_i32_1 = arith.constant 0 : i32
    return %c0_i32, %c0_i32_0 : i32, i32
  }
  func.func @transform_9(%arg0: i32) -> (i32, i32) {
    %c0_i32 = arith.constant 0 : i32
    %c0_i32_0 = arith.constant 0 : i32
    %c0_i32_1 = arith.constant 0 : i32
    return %c0_i32, %c0_i32_0 : i32, i32
  }
  func.func @transform_10(%arg0: i32) -> (i32, i32) {
    %c0_i32 = arith.constant 0 : i32
    %c0_i32_0 = arith.constant 0 : i32
    %c0_i32_1 = arith.constant 0 : i32
    return %c0_i32, %c0_i32_0 : i32, i32
  }
  func.func @transform_11(%arg0: i32) -> (i32, i32) {
    %c0_i32 = arith.constant 0 : i32
    %c0_i32_0 = arith.constant 0 : i32
    return %arg0, %c0_i32 : i32, i32
  }
}

</mosaic_0001>

<llo_original>
// kernel: tpu_custom_call.1
$region0: #{tpu_custom_call.1}
  #allocation0 [shape = 'u32[]', space=smem, size = 0x4, offset = 0x4, fixed_abs, tag = 'smem constant byte address 0x4 - core index']
  #allocation1 [shape = 'u32[72,128]{1,0:T(1,128)}', space=vmem, size = 0x9000, scoped, tag = 'internal scratch']
  %s0 = inlined_call_operand.hbm [shape: f32[8,32], index: 0, kind: input, shape index: {}]
  %s1 = inlined_call_operand.hbm [shape: f32[1,32], index: 1, kind: input, shape index: {}]
  %s2 = inlined_call_operand.hbm [shape: f32[1,32], index: 2, kind: input, shape index: {}]
  %s3 = inlined_call_operand.hbm [shape: bf16[32,256], index: 3, kind: input, shape index: {}]
  %s4 = inlined_call_operand.vmem [shape: f32[1,256], index: 4, kind: input, shape index: {}]
  %s5 = inlined_call_operand.hbm [shape: bf16[256,256], index: 5, kind: input, shape index: {}]
  %s6 = inlined_call_operand.vmem [shape: f32[1,256], index: 6, kind: input, shape index: {}]
  %s7 = inlined_call_operand.hbm [shape: bf16[256,128], index: 7, kind: input, shape index: {}]
  %s8 = inlined_call_operand.vmem [shape: f32[1,128], index: 8, kind: input, shape index: {}]
  %s9 = inlined_call_operand.hbm [shape: bf16[128,128], index: 9, kind: input, shape index: {}]
  %s10 = inlined_call_operand.vmem [shape: f32[1,128], index: 10, kind: input, shape index: {}]
  %s11 = inlined_call_operand.hbm [shape: f32[8,128], index: 11, kind: output, shape index: {}]
  %s12 = sld [smem:[#allocation0]]
  $region82: #{tpu_custom_call.1} parent=0
    _
  %s14 = ssub.s32 1, %s12
  %s15 = scalar_select 0, %s14, %s12
  $region1: #{tpu_custom_call.1} parent=0
    #allocation2 [shape = 'u8[4096]{0}', space=vmem, size = 0x1000, scoped, tag = 'input window, operand 0, single buffered']
    #allocation3 [shape = 's32[1]{0}', space=sflag, size = 0x4, scoped, tag = 'scoped memory for tpu_custom_call.1']
    #allocation4 [shape = 's32[1]{0}', space=sflag, size = 0x4, scoped, tag = 'scoped memory for tpu_custom_call.1']
    #allocation5 [shape = 'u8[512]{0}', space=vmem, size = 0x400, scoped, tag = 'input window, operand 1, single buffered']
    #allocation6 [shape = 's32[1]{0}', space=sflag, size = 0x4, scoped, tag = 'scoped memory for tpu_custom_call.1']
    #allocation7 [shape = 'u8[512]{0}', space=vmem, size = 0x400, scoped, tag = 'input window, operand 2, single buffered']
    #allocation8 [shape = 'u8[16384]{0}', space=vmem, size = 0x4000, scoped, tag = 'input window, operand 3, single buffered']
    #allocation9 [shape = 's32[1]{0}', space=sflag, size = 0x4, scoped, tag = 'scoped memory for tpu_custom_call.1']
    #allocation10 [shape = 'u8[131072]{0}', space=vmem, size = 0x20000, scoped, tag = 'input window, operand 5, single buffered']
    #allocation11 [shape = 'u8[65536]{0}', space=vmem, size = 0x10000, scoped, tag = 'input window, operand 7, single buffered']
    #allocation12 [shape = 's32[1]{0}', space=sflag, size = 0x4, scoped, tag = 'scoped memory for tpu_custom_call.1']
    #allocation13 [shape = 'u8[32768]{0}', space=vmem, size = 0x8000, scoped, tag = 'input window, operand 9, single buffered']
    #allocation14 [shape = 'u8[4096]{0}', space=vmem, size = 0x1000, scoped, tag = 'output window, operand 0, single buffered']
    %16 = vsyncpa [#allocation3], 0
    %17 = vsyncpa [#allocation6], 0
    %18 = vsyncpa [#allocation9], 0
    %19 = vsyncpa [#allocation12], 0
    %20 = vsyncpa [#allocation4], 0
    // Predicated region
    $region2: #{tpu_custom_call.1} parent=1 // pred_check
      _
    $region3: #{tpu_custom_call.1} parent=1 // pred_check_branch
      %22 = sbr.rel (0) target = $region5
    $region4: #{tpu_custom_call.1} parent=1 // pred_region
      %24 = vsyncadd [#allocation3], 0
      %s26 = sshll.u32 %s0, 4
      %s27 = int_to_ptr.hbm [resolvable:$true] %s26
      %s28 = sshll.u32 [#allocation2], 4
      %s29 = int_to_ptr.vmem [resolvable:$true] %s28
      %31 = dma.hbm_to_vmem [thread:$0]  %s27, 128, %s29, [#allocation3]
    $region5: #{tpu_custom_call.1} parent=1 // pred_fallthru
      _
    // Predicated region
    $region6: #{tpu_custom_call.1} parent=1 // pred_check
      _
    $region7: #{tpu_custom_call.1} parent=1 // pred_check_branch
      %33 = sbr.rel (0) target = $region9
    $region8: #{tpu_custom_call.1} parent=1 // pred_region
      %35 = vsyncadd [#allocation6], 0
      %s37 = sshll.u32 %s1, 4
      %s38 = int_to_ptr.hbm [resolvable:$true] %s37
      %s39 = sshll.u32 [#allocation5], 4
      %s40 = int_to_ptr.vmem [resolvable:$true] %s39
      %42 = dma.hbm_to_vmem [thread:$0]  %s38, 16, %s40, [#allocation6]
    $region9: #{tpu_custom_call.1} parent=1 // pred_fallthru
      _
    // Predicated region
    $region10: #{tpu_custom_call.1} parent=1 // pred_check
      _
    $region11: #{tpu_custom_call.1} parent=1 // pred_check_branch
      %44 = sbr.rel (0) target = $region13
    $region12: #{tpu_custom_call.1} parent=1 // pred_region
      %46 = vsyncadd [#allocation6], 0
      %s48 = sshll.u32 %s2, 4
      %s49 = int_to_ptr.hbm [resolvable:$true] %s48
      %s50 = sshll.u32 [#allocation7], 4
      %s51 = int_to_ptr.vmem [resolvable:$true] %s50
      %53 = dma.hbm_to_vmem [thread:$0]  %s49, 16, %s51, [#allocation6]
    $region13: #{tpu_custom_call.1} parent=1 // pred_fallthru
      _
    // Predicated region
    $region14: #{tpu_custom_call.1} parent=1 // pred_check
      _
    $region15: #{tpu_custom_call.1} parent=1 // pred_check_branch
      %55 = sbr.rel (0) target = $region17
    $region16: #{tpu_custom_call.1} parent=1 // pred_region
      %57 = vsyncadd [#allocation9], 0
      %s58 = sshll.u32 %s3, 4
      %s59 = int_to_ptr.hbm [resolvable:$true] %s58
      %s60 = sshll.u32 [#allocation8], 4
      %s61 = int_to_ptr.vmem [resolvable:$true] %s60
      %66 = dma.hbm_to_vmem [thread:$0]  %s59, 512, %s61, [#allocation9], 128, 128, 8
    $region17: #{tpu_custom_call.1} parent=1 // pred_fallthru
      _
    // Predicated region
    $region18: #{tpu_custom_call.1} parent=1 // pred_check
      _
    $region19: #{tpu_custom_call.1} parent=1 // pred_check_branch
      %68 = sbr.rel (0) target = $region21
    $region20: #{tpu_custom_call.1} parent=1 // pred_region
      _
    $region21: #{tpu_custom_call.1} parent=1 // pred_fallthru
      _
    // Predicated region
    $region22: #{tpu_custom_call.1} parent=1 // pred_check
      _
    $region23: #{tpu_custom_call.1} parent=1 // pred_check_branch
      %70 = sbr.rel (0) target = $region25
    $region24: #{tpu_custom_call.1} parent=1 // pred_region
      %72 = vsyncadd [#allocation9], 0
      %s73 = sshll.u32 %s5, 4
      %s74 = int_to_ptr.hbm [resolvable:$true] %s73
      %s75 = sshll.u32 [#allocation10], 4
      %s76 = int_to_ptr.vmem [resolvable:$true] %s75
      %81 = dma.hbm_to_vmem [thread:$0]  %s74, 4096, %s76, [#allocation9], 128, 128, 8
    $region25: #{tpu_custom_call.1} parent=1 // pred_fallthru
      _
    // Predicated region
    $region26: #{tpu_custom_call.1} parent=1 // pred_check
      _
    $region27: #{tpu_custom_call.1} parent=1 // pred_check_branch
      %83 = sbr.rel (0) target = $region29
    $region28: #{tpu_custom_call.1} parent=1 // pred_region
      _
    $region29: #{tpu_custom_call.1} parent=1 // pred_fallthru
      _
    // Predicated region
    $region30: #{tpu_custom_call.1} parent=1 // pred_check
      _
    $region31: #{tpu_custom_call.1} parent=1 // pred_check_branch
      %85 = sbr.rel (0) target = $region33
    $region32: #{tpu_custom_call.1} parent=1 // pred_region
      %87 = vsyncadd [#allocation12], 0
      %s88 = sshll.u32 %s7, 4
      %s89 = int_to_ptr.hbm [resolvable:$true] %s88
      %s90 = sshll.u32 [#allocation11], 4
      %s91 = int_to_ptr.vmem [resolvable:$true] %s90
      %96 = dma.hbm_to_vmem [thread:$0]  %s89, 2048, %s91, [#allocation12], 64, 64, 4
    $region33: #{tpu_custom_call.1} parent=1 // pred_fallthru
      _
    // Predicated region
    $region34: #{tpu_custom_call.1} parent=1 // pred_check
      _
    $region35: #{tpu_custom_call.1} parent=1 // pred_check_branch
      %98 = sbr.rel (0) target = $region37
    $region36: #{tpu_custom_call.1} parent=1 // pred_region
      _
    $region37: #{tpu_custom_call.1} parent=1 // pred_fallthru
      _
    // Predicated region
    $region38: #{tpu_custom_call.1} parent=1 // pred_check
      _
    $region39: #{tpu_custom_call.1} parent=1 // pred_check_branch
      %100 = sbr.rel (0) target = $region41
    $region40: #{tpu_custom_call.1} parent=1 // pred_region
      %102 = vsyncadd [#allocation12], 0
      %s103 = sshll.u32 %s9, 4
      %s104 = int_to_ptr.hbm [resolvable:$true] %s103
      %s105 = sshll.u32 [#allocation13], 4
      %s106 = int_to_ptr.vmem [resolvable:$true] %s105
      %111 = dma.hbm_to_vmem [thread:$0]  %s104, 1024, %s106, [#allocation12], 64, 64, 4
    $region41: #{tpu_custom_call.1} parent=1 // pred_fallthru
      _
    // Predicated region
    $region42: #{tpu_custom_call.1} parent=1 // pred_check
      _
    $region43: #{tpu_custom_call.1} parent=1 // pred_check_branch
      %113 = sbr.rel (0) target = $region45
    $region44: #{tpu_custom_call.1} parent=1 // pred_region
      _
    $region45: #{tpu_custom_call.1} parent=1 // pred_fallthru
      _
    // Predicated region
    $region46: #{tpu_custom_call.1} parent=1 // pred_check
      _
    $region47: #{tpu_custom_call.1} parent=1 // pred_check_branch
      %115 = sbr.rel (0) target = $region49
    $region48: #{tpu_custom_call.1} parent=1 // pred_region
      %117 = dma.done [#allocation3], 128
    $region49: #{tpu_custom_call.1} parent=1 // pred_fallthru
      _
    // Predicated region
    $region50: #{tpu_custom_call.1} parent=1 // pred_check
      _
    $region51: #{tpu_custom_call.1} parent=1 // pred_check_branch
      %119 = sbr.rel (0) target = $region53
    $region52: #{tpu_custom_call.1} parent=1 // pred_region
      %121 = dma.done [#allocation6], 16
    $region53: #{tpu_custom_call.1} parent=1 // pred_fallthru
      _
    // Predicated region
    $region54: #{tpu_custom_call.1} parent=1 // pred_check
      _
    $region55: #{tpu_custom_call.1} parent=1 // pred_check_branch
      %123 = sbr.rel (0) target = $region57
    $region56: #{tpu_custom_call.1} parent=1 // pred_region
      %125 = dma.done [#allocation6], 16
    $region57: #{tpu_custom_call.1} parent=1 // pred_fallthru
      _
    // Predicated region
    $region58: #{tpu_custom_call.1} parent=1 // pred_check
      _
    $region59: #{tpu_custom_call.1} parent=1 // pred_check_branch
      %127 = sbr.rel (0) target = $region61
    $region60: #{tpu_custom_call.1} parent=1 // pred_region
      %129 = dma.done [#allocation9], 512
    $region61: #{tpu_custom_call.1} parent=1 // pred_fallthru
      _
    // Predicated region
    $region62: #{tpu_custom_call.1} parent=1 // pred_check
      _
    $region63: #{tpu_custom_call.1} parent=1 // pred_check_branch
      %131 = sbr.rel (0) target = $region65
    $region64: #{tpu_custom_call.1} parent=1 // pred_region
      %133 = dma.done [#allocation9], 4096
    $region65: #{tpu_custom_call.1} parent=1 // pred_fallthru
      _
    // Predicated region
    $region66: #{tpu_custom_call.1} parent=1 // pred_check
      _
    $region67: #{tpu_custom_call.1} parent=1 // pred_check_branch
      %135 = sbr.rel (0) target = $region69
    $region68: #{tpu_custom_call.1} parent=1 // pred_region
      %137 = dma.done [#allocation12], 2048
    $region69: #{tpu_custom_call.1} parent=1 // pred_fallthru
      _
    // Predicated region
    $region70: #{tpu_custom_call.1} parent=1 // pred_check
      _
    $region71: #{tpu_custom_call.1} parent=1 // pred_check_branch
      %139 = sbr.rel (0) target = $region73
    $region72: #{tpu_custom_call.1} parent=1 // pred_region
      %141 = dma.done [#allocation12], 1024
    $region73: #{tpu_custom_call.1} parent=1 // pred_fallthru
      _
    %v143 = vld [vmem:[#allocation2] sm:$0xff]
    %vm144 = vcmask 261120
    %v145 = vsel %vm144, %v143, 0.0
    %146 = vadd.xlane.f32.xlu0 %v145
    %v147 = vpop.xlane.xlu0 %146
    %v148 = vrcp.pop 32.0
    %v149 = vmul.f32 32.0, %v148
    %v150 = vsub.f32 1.0, %v149
    %v151 = vmul.f32 %v148, %v150
    %v152 = vadd.f32 %v148, %v151
    %vm153 = vweird.f32 %v148
    %v154 = vsel %vm153, %v148, %v152
    %v155 = vmul.f32 %v147, %v154
    %v156 = vsub.f32 %v143, %v155
    %v157 = vmul.f32 %v156, %v156
    %v158 = vsel %vm144, %v157, 0.0
    %159 = vadd.xlane.f32.xlu0 %v158
    %v160 = vpop.xlane.xlu0 %159
    %v161 = vmul.f32 %v160, %v154
    %v162 = vadd.f32 %v161, 1e-05
    %v163 = vrsqrt.pop %v162
    %v164 = vmul.f32 %v163, %v162
    %v165 = vmul.f32 %v164, %v163
    %v166 = vmul.f32 0.5, %v165
    %v167 = vsub.f32 1.5, %v166
    %v168 = vmul.f32 %v163, %v167
    %vm169 = vweird.f32 %v162
    %vm170 = vweird.f32 %v163
    %vm171 = vmor %vm169, %vm170
    %v172 = vsel %vm171, %v163, %v168
    %v173 = vmul.f32 %v156, %v172
    %v174 = vld [vmem:[#allocation5] sm:$0x1]
    %v176 = vperm.slane %v174, 0
    %v178 = vmul.f32 %v173, %v176
    %v179 = vld [vmem:[#allocation7] sm:$0x1]
    %v181 = vperm.slane %v179, 0
    %v183 = vadd.f32 %v178, %v181
    %v184 = vtanh.pop %v183
    %v185 = vpack.c.bf16 %v184, %v184
    %v186 = vld [vmem:[#allocation8] sm:$0xff]
    %v187 = vld [vmem:[#allocation8 + $0x8] sm:$0xff]
    %v188 = vld [vmem:[#allocation8 + $0x10] sm:$0xff]
    %v189 = vld [vmem:[#allocation8 + $0x18] sm:$0xff]
    %v190 = vld [vmem:[%s4] sm:$0x3]
    %v192 = vperm.slane %v190, 0
    %v193 = vperm.slane %v190, 1
    %v200 = vunpack.c.l.b16 %v186
    %v201 = vunpack.c.h.b16 %v186
    %v202 = vunpack.c.l.b16 %v187
    %v203 = vunpack.c.h.b16 %v187
    %v204 = vunpack.c.l.b16 %v188
    %v205 = vunpack.c.h.b16 %v188
    %v206 = vunpack.c.l.b16 %v189
    %v207 = vunpack.c.h.b16 %v189
    %v208 = vpack.c.b16 %v202, %v200
    %v209 = vpack.c.b16 %v203, %v201
    %v210 = vpack.c.b16 %v206, %v204
    %v211 = vpack.c.b16 %v207, %v205
    %v217 = vsel %vm144, %v185, 0
    %219 = vmatpush.bf16.msra.mxu0 0
    %220 = vmatpush.bf16.msra.mxu0 0
    %221 = vmatpush.bf16.msra.mxu0 0
    %222 = vmatpush.bf16.msra.mxu0 0
    %223 = vmatpush.bf16.msra.mxu0 0
    %224 = vmatpush.bf16.msra.mxu0 0
    %225 = vmatpush.bf16.msra.mxu0 %v210
    %226 = vmatpush.bf16.msra.mxu0 %v208
    %227 = vmatmul.bf16.gmra.mxu0 %v217
    %v228 = vpop.f32.mrf.mxu0
    %v229 = vadd.f32 %v192, %v228
    %v230 = vpop.f32.mrf.mxu0
    %231 = vdwg.mxu0
    %232 = vmatpush.bf16.msra.mxu0 0
    %233 = vmatpush.bf16.msra.mxu0 0
    %234 = vmatpush.bf16.msra.mxu0 0
    %235 = vmatpush.bf16.msra.mxu0 0
    %236 = vmatpush.bf16.msra.mxu0 0
    %237 = vmatpush.bf16.msra.mxu0 0
    %238 = vmatpush.bf16.msra.mxu0 %v211
    %239 = vmatpush.bf16.msra.mxu0 %v209
    %240 = vmatmul.bf16.gmra.mxu0 %v217
    %v241 = vpop.f32.mrf.mxu0
    %v242 = vadd.f32 %v193, %v241
    %v243 = vpop.f32.mrf.mxu0
    %244 = vdwg.mxu0
    %v245 = vmax.f32 %v229, 0.0
    %v246 = vmax.f32 %v242, 0.0
    %v247 = vpack.c.bf16 %v245, %v245
    %v248 = vpack.c.bf16 %v246, %v246
    %v249 = vld [vmem:[#allocation10] sm:$0xff]
    %v250 = vld [vmem:[#allocation10 + $0x8] sm:$0xff]
    %v251 = vld [vmem:[#allocation10 + $0x10] sm:$0xff]
    %v252 = vld [vmem:[#allocation10 + $0x18] sm:$0xff]
    %v253 = vld [vmem:[#allocation10 + $0x20] sm:$0xff]
    %v254 = vld [vmem:[#allocation10 + $0x28] sm:$0xff]
    %v255 = vld [vmem:[#allocation10 + $0x30] sm:$0xff]
    %v256 = vld [vmem:[#allocation10 + $0x38] sm:$0xff]
    %v257 = vld [vmem:[#allocation10 + $0x40] sm:$0xff]
    %v258 = vld [vmem:[#allocation10 + $0x48] sm:$0xff]
    %v259 = vld [vmem:[#allocation10 + $0x50] sm:$0xff]
    %v260 = vld [vmem:[#allocation10 + $0x58] sm:$0xff]
    %v261 = vld [vmem:[#allocation10 + $0x60] sm:$0xff]
    %v262 = vld [vmem:[#allocation10 + $0x68] sm:$0xff]
    %v263 = vld [vmem:[#allocation10 + $0x70] sm:$0xff]
    %v264 = vld [vmem:[#allocation10 + $0x78] sm:$0xff]
    %v265 = vld [vmem:[#allocation10 + $0x80] sm:$0xff]
    %v266 = vld [vmem:[#allocation10 + $0x88] sm:$0xff]
    %v267 = vld [vmem:[#allocation10 + $0x90] sm:$0xff]
    %v268 = vld [vmem:[#allocation10 + $0x98] sm:$0xff]
    %v269 = vld [vmem:[#allocation10 + $0xa0] sm:$0xff]
    %v270 = vld [vmem:[#allocation10 + $0xa8] sm:$0xff]
    %v271 = vld [vmem:[#allocation10 + $0xb0] sm:$0xff]
    %v272 = vld [vmem:[#allocation10 + $0xb8] sm:$0xff]
    %v273 = vld [vmem:[#allocation10 + $0xc0] sm:$0xff]
    %v274 = vld [vmem:[#allocation10 + $0xc8] sm:$0xff]
    %v275 = vld [vmem:[#allocation10 + $0xd0] sm:$0xff]
    %v276 = vld [vmem:[#allocation10 + $0xd8] sm:$0xff]
    %v277 = vld [vmem:[#allocation10 + $0xe0] sm:$0xff]
    %v278 = vld [vmem:[#allocation10 + $0xe8] sm:$0xff]
    %v279 = vld [vmem:[#allocation10 + $0xf0] sm:$0xff]
    %v280 = vld [vmem:[#allocation10 + $0xf8] sm:$0xff]
    %v281 = vld [vmem:[%s6] sm:$0x3]
    %v283 = vperm.slane %v281, 0
    %v284 = vperm.slane %v281, 1
    %v319 = vunpack.c.l.b16 %v249
    %v320 = vunpack.c.h.b16 %v249
    %v321 = vunpack.c.l.b16 %v250
    %v322 = vunpack.c.h.b16 %v250
    %v323 = vunpack.c.l.b16 %v251
    %v324 = vunpack.c.h.b16 %v251
    %v325 = vunpack.c.l.b16 %v252
    %v326 = vunpack.c.h.b16 %v252
    %v327 = vunpack.c.l.b16 %v253
    %v328 = vunpack.c.h.b16 %v253
    %v329 = vunpack.c.l.b16 %v254
    %v330 = vunpack.c.h.b16 %v254
    %v331 = vunpack.c.l.b16 %v255
    %v332 = vunpack.c.h.b16 %v255
    %v333 = vunpack.c.l.b16 %v256
    %v334 = vunpack.c.h.b16 %v256
    %v335 = vunpack.c.l.b16 %v257
    %v336 = vunpack.c.h.b16 %v257
    %v337 = vunpack.c.l.b16 %v258
    %v338 = vunpack.c.h.b16 %v258
    %v339 = vunpack.c.l.b16 %v259
    %v340 = vunpack.c.h.b16 %v259
    %v341 = vunpack.c.l.b16 %v260
    %v342 = vunpack.c.h.b16 %v260
    %v343 = vunpack.c.l.b16 %v261
    %v344 = vunpack.c.h.b16 %v261
    %v345 = vunpack.c.l.b16 %v262
    %v346 = vunpack.c.h.b16 %v262
    %v347 = vunpack.c.l.b16 %v263
    %v348 = vunpack.c.h.b16 %v263
    %v349 = vunpack.c.l.b16 %v264
    %v350 = vunpack.c.h.b16 %v264
    %v351 = vunpack.c.l.b16 %v265
    %v352 = vunpack.c.h.b16 %v265
    %v353 = vunpack.c.l.b16 %v266
    %v354 = vunpack.c.h.b16 %v266
    %v355 = vunpack.c.l.b16 %v267
    %v356 = vunpack.c.h.b16 %v267
    %v357 = vunpack.c.l.b16 %v268
    %v358 = vunpack.c.h.b16 %v268
    %v359 = vunpack.c.l.b16 %v269
    %v360 = vunpack.c.h.b16 %v269
    %v361 = vunpack.c.l.b16 %v270
    %v362 = vunpack.c.h.b16 %v270
    %v363 = vunpack.c.l.b16 %v271
    %v364 = vunpack.c.h.b16 %v271
    %v365 = vunpack.c.l.b16 %v272
    %v366 = vunpack.c.h.b16 %v272
    %v367 = vunpack.c.l.b16 %v273
    %v368 = vunpack.c.h.b16 %v273
    %v369 = vunpack.c.l.b16 %v274
    %v370 = vunpack.c.h.b16 %v274
    %v371 = vunpack.c.l.b16 %v275
    %v372 = vunpack.c.h.b16 %v275
    %v373 = vunpack.c.l.b16 %v276
    %v374 = vunpack.c.h.b16 %v276
    %v375 = vunpack.c.l.b16 %v277
    %v376 = vunpack.c.h.b16 %v277
    %v377 = vunpack.c.l.b16 %v278
    %v378 = vunpack.c.h.b16 %v278
    %v379 = vunpack.c.l.b16 %v279
    %v380 = vunpack.c.h.b16 %v279
    %v381 = vunpack.c.l.b16 %v280
    %v382 = vunpack.c.h.b16 %v280
    %v383 = vpack.c.b16 %v321, %v319
    %v384 = vpack.c.b16 %v322, %v320
    %v385 = vpack.c.b16 %v325, %v323
    %v386 = vpack.c.b16 %v326, %v324
    %v387 = vpack.c.b16 %v329, %v327
    %v388 = vpack.c.b16 %v330, %v328
    %v389 = vpack.c.b16 %v333, %v331
    %v390 = vpack.c.b16 %v334, %v332
    %v391 = vpack.c.b16 %v337, %v335
    %v392 = vpack.c.b16 %v338, %v336
    %v393 = vpack.c.b16 %v341, %v339
    %v394 = vpack.c.b16 %v342, %v340
    %v395 = vpack.c.b16 %v345, %v343
    %v396 = vpack.c.b16 %v346, %v344
    %v397 = vpack.c.b16 %v349, %v347
    %v398 = vpack.c.b16 %v350, %v348
    %v399 = vpack.c.b16 %v353, %v351
    %v400 = vpack.c.b16 %v354, %v352
    %v401 = vpack.c.b16 %v357, %v355
    %v402 = vpack.c.b16 %v358, %v356
    %v403 = vpack.c.b16 %v361, %v359
    %v404 = vpack.c.b16 %v362, %v360
    %v405 = vpack.c.b16 %v365, %v363
    %v406 = vpack.c.b16 %v366, %v364
    %v407 = vpack.c.b16 %v369, %v367
    %v408 = vpack.c.b16 %v370, %v368
    %v409 = vpack.c.b16 %v373, %v371
    %v410 = vpack.c.b16 %v374, %v372
    %v411 = vpack.c.b16 %v377, %v375
    %v412 = vpack.c.b16 %v378, %v376
    %v413 = vpack.c.b16 %v381, %v379
    %v414 = vpack.c.b16 %v382, %v380
    %447 = vmatpush.bf16.msra.mxu0 %v397
    %448 = vmatpush.bf16.msra.mxu0 %v395
    %449 = vmatpush.bf16.msra.mxu0 %v393
    %450 = vmatpush.bf16.msra.mxu0 %v391
    %451 = vmatpush.bf16.msra.mxu0 %v389
    %452 = vmatpush.bf16.msra.mxu0 %v387
    %453 = vmatpush.bf16.msra.mxu0 %v385
    %454 = vmatpush.bf16.msra.mxu0 %v383
    %455 = vmatmul.bf16.gmra.mxu0 %v247
    %v456 = vpop.f32.mrf.mxu0
    %v457 = vadd.f32 %v283, %v456
    %v458 = vpop.f32.mrf.mxu0
    %459 = vdwg.mxu0
    %460 = vmatpush.bf16.msra.mxu0 %v413
    %461 = vmatpush.bf16.msra.mxu0 %v411
    %462 = vmatpush.bf16.msra.mxu0 %v409
    %463 = vmatpush.bf16.msra.mxu0 %v407
    %464 = vmatpush.bf16.msra.mxu0 %v405
    %465 = vmatpush.bf16.msra.mxu0 %v403
    %466 = vmatpush.bf16.msra.mxu0 %v401
    %467 = vmatpush.bf16.msra.mxu0 %v399
    %468 = vmatmul.bf16.gmra.mxu0 %v248
    %v469 = vpop.f32.mrf.mxu0
    %v470 = vadd.f32 %v457, %v469
    %v471 = vpop.f32.mrf.mxu0
    %472 = vdwg.mxu0
    %473 = vmatpush.bf16.msra.mxu0 %v398
    %474 = vmatpush.bf16.msra.mxu0 %v396
    %475 = vmatpush.bf16.msra.mxu0 %v394
    %476 = vmatpush.bf16.msra.mxu0 %v392
    %477 = vmatpush.bf16.msra.mxu0 %v390
    %478 = vmatpush.bf16.msra.mxu0 %v388
    %479 = vmatpush.bf16.msra.mxu0 %v386
    %480 = vmatpush.bf16.msra.mxu0 %v384
    %481 = vmatmul.bf16.gmra.mxu0 %v247
    %v482 = vpop.f32.mrf.mxu0
    %v483 = vadd.f32 %v284, %v482
    %v484 = vpop.f32.mrf.mxu0
    %485 = vdwg.mxu0
    %486 = vmatpush.bf16.msra.mxu0 %v414
    %487 = vmatpush.bf16.msra.mxu0 %v412
    %488 = vmatpush.bf16.msra.mxu0 %v410
    %489 = vmatpush.bf16.msra.mxu0 %v408
    %490 = vmatpush.bf16.msra.mxu0 %v406
    %491 = vmatpush.bf16.msra.mxu0 %v404
    %492 = vmatpush.bf16.msra.mxu0 %v402
    %493 = vmatpush.bf16.msra.mxu0 %v400
    %494 = vmatmul.bf16.gmra.mxu0 %v248
    %v495 = vpop.f32.mrf.mxu0
    %v496 = vadd.f32 %v483, %v495
    %v497 = vpop.f32.mrf.mxu0
    %498 = vdwg.mxu0
    %v499 = vmax.f32 %v470, 0.0
    %v500 = vmax.f32 %v496, 0.0
    %v501 = vpack.c.bf16 %v499, %v499
    %v502 = vpack.c.bf16 %v500, %v500
    %v503 = vld [vmem:[#allocation11] sm:$0xf]
    %v504 = vld [vmem:[#allocation11 + $0x4] sm:$0xf]
    %v505 = vld [vmem:[#allocation11 + $0x8] sm:$0xf]
    %v506 = vld [vmem:[#allocation11 + $0xc] sm:$0xf]
    %v507 = vld [vmem:[#allocation11 + $0x10] sm:$0xf]
    %v508 = vld [vmem:[#allocation11 + $0x14] sm:$0xf]
    %v509 = vld [vmem:[#allocation11 + $0x18] sm:$0xf]
    %v510 = vld [vmem:[#allocation11 + $0x1c] sm:$0xf]
    %v511 = vld [vmem:[#allocation11 + $0x20] sm:$0xf]
    %v512 = vld [vmem:[#allocation11 + $0x24] sm:$0xf]
    %v513 = vld [vmem:[#allocation11 + $0x28] sm:$0xf]
    %v514 = vld [vmem:[#allocation11 + $0x2c] sm:$0xf]
    %v515 = vld [vmem:[#allocation11 + $0x30] sm:$0xf]
    %v516 = vld [vmem:[#allocation11 + $0x34] sm:$0xf]
    %v517 = vld [vmem:[#allocation11 + $0x38] sm:$0xf]
    %v518 = vld [vmem:[#allocation11 + $0x3c] sm:$0xf]
    %v519 = vld [vmem:[#allocation11 + $0x40] sm:$0xf]
    %v520 = vld [vmem:[#allocation11 + $0x44] sm:$0xf]
    %v521 = vld [vmem:[#allocation11 + $0x48] sm:$0xf]
    %v522 = vld [vmem:[#allocation11 + $0x4c] sm:$0xf]
    %v523 = vld [vmem:[#allocation11 + $0x50] sm:$0xf]
    %v524 = vld [vmem:[#allocation11 + $0x54] sm:$0xf]
    %v525 = vld [vmem:[#allocation11 + $0x58] sm:$0xf]
    %v526 = vld [vmem:[#allocation11 + $0x5c] sm:$0xf]
    %v527 = vld [vmem:[#allocation11 + $0x60] sm:$0xf]
    %v528 = vld [vmem:[#allocation11 + $0x64] sm:$0xf]
    %v529 = vld [vmem:[#allocation11 + $0x68] sm:$0xf]
    %v530 = vld [vmem:[#allocation11 + $0x6c] sm:$0xf]
    %v531 = vld [vmem:[#allocation11 + $0x70] sm:$0xf]
    %v532 = vld [vmem:[#allocation11 + $0x74] sm:$0xf]
    %v533 = vld [vmem:[#allocation11 + $0x78] sm:$0xf]
    %v534 = vld [vmem:[#allocation11 + $0x7c] sm:$0xf]
    %v535 = vld [vmem:[%s8] sm:$0x1]
    %v537 = vperm.slane %v535, 0
    %v571 = vunpack.c.l.b16 %v503
    %v572 = vunpack.c.l.b16 %v504
    %v573 = vunpack.c.l.b16 %v505
    %v574 = vunpack.c.l.b16 %v506
    %v575 = vunpack.c.l.b16 %v507
    %v576 = vunpack.c.l.b16 %v508
    %v577 = vunpack.c.l.b16 %v509
    %v578 = vunpack.c.l.b16 %v510
    %v579 = vunpack.c.l.b16 %v511
    %v580 = vunpack.c.l.b16 %v512
    %v581 = vunpack.c.l.b16 %v513
    %v582 = vunpack.c.l.b16 %v514
    %v583 = vunpack.c.l.b16 %v515
    %v584 = vunpack.c.l.b16 %v516
    %v585 = vunpack.c.l.b16 %v517
    %v586 = vunpack.c.l.b16 %v518
    %v587 = vunpack.c.l.b16 %v519
    %v588 = vunpack.c.l.b16 %v520
    %v589 = vunpack.c.l.b16 %v521
    %v590 = vunpack.c.l.b16 %v522
    %v591 = vunpack.c.l.b16 %v523
    %v592 = vunpack.c.l.b16 %v524
    %v593 = vunpack.c.l.b16 %v525
    %v594 = vunpack.c.l.b16 %v526
    %v595 = vunpack.c.l.b16 %v527
    %v596 = vunpack.c.l.b16 %v528
    %v597 = vunpack.c.l.b16 %v529
    %v598 = vunpack.c.l.b16 %v530
    %v599 = vunpack.c.l.b16 %v531
    %v600 = vunpack.c.l.b16 %v532
    %v601 = vunpack.c.l.b16 %v533
    %v602 = vunpack.c.l.b16 %v534
    %v603 = vpack.c.b16 %v572, %v571
    %v604 = vpack.c.b16 %v574, %v573
    %v605 = vpack.c.b16 %v576, %v575
    %v606 = vpack.c.b16 %v578, %v577
    %v607 = vpack.c.b16 %v580, %v579
    %v608 = vpack.c.b16 %v582, %v581
    %v609 = vpack.c.b16 %v584, %v583
    %v610 = vpack.c.b16 %v586, %v585
    %v611 = vpack.c.b16 %v588, %v587
    %v612 = vpack.c.b16 %v590, %v589
    %v613 = vpack.c.b16 %v592, %v591
    %v614 = vpack.c.b16 %v594, %v593
    %v615 = vpack.c.b16 %v596, %v595
    %v616 = vpack.c.b16 %v598, %v597
    %v617 = vpack.c.b16 %v600, %v599
    %v618 = vpack.c.b16 %v602, %v601
    %635 = vmatpush.bf16.msra.mxu0 %v610
    %636 = vmatpush.bf16.msra.mxu0 %v609
    %637 = vmatpush.bf16.msra.mxu0 %v608
    %638 = vmatpush.bf16.msra.mxu0 %v607
    %639 = vmatpush.bf16.msra.mxu0 %v606
    %640 = vmatpush.bf16.msra.mxu0 %v605
    %641 = vmatpush.bf16.msra.mxu0 %v604
    %642 = vmatpush.bf16.msra.mxu0 %v603
    %643 = vmatmul.bf16.gmra.mxu0 %v501
    %v644 = vpop.f32.mrf.mxu0
    %v645 = vadd.f32 %v537, %v644
    %v646 = vpop.f32.mrf.mxu0
    %647 = vdwg.mxu0
    %648 = vmatpush.bf16.msra.mxu0 %v618
    %649 = vmatpush.bf16.msra.mxu0 %v617
    %650 = vmatpush.bf16.msra.mxu0 %v616
    %651 = vmatpush.bf16.msra.mxu0 %v615
    %652 = vmatpush.bf16.msra.mxu0 %v614
    %653 = vmatpush.bf16.msra.mxu0 %v613
    %654 = vmatpush.bf16.msra.mxu0 %v612
    %655 = vmatpush.bf16.msra.mxu0 %v611
    %656 = vmatmul.bf16.gmra.mxu0 %v502
    %v657 = vpop.f32.mrf.mxu0
    %v658 = vadd.f32 %v645, %v657
    %v659 = vpop.f32.mrf.mxu0
    %660 = vdwg.mxu0
    %v661 = vmax.f32 %v658, 0.0
    %v662 = vpack.c.bf16 %v661, %v661
    %v663 = vld [vmem:[#allocation13] sm:$0xf]
    %v664 = vld [vmem:[#allocation13 + $0x4] sm:$0xf]
    %v665 = vld [vmem:[#allocation13 + $0x8] sm:$0xf]
    %v666 = vld [vmem:[#allocation13 + $0xc] sm:$0xf]
    %v667 = vld [vmem:[#allocation13 + $0x10] sm:$0xf]
    %v668 = vld [vmem:[#allocation13 + $0x14] sm:$0xf]
    %v669 = vld [vmem:[#allocation13 + $0x18] sm:$0xf]
    %v670 = vld [vmem:[#allocation13 + $0x1c] sm:$0xf]
    %v671 = vld [vmem:[#allocation13 + $0x20] sm:$0xf]
    %v672 = vld [vmem:[#allocation13 + $0x24] sm:$0xf]
    %v673 = vld [vmem:[#allocation13 + $0x28] sm:$0xf]
    %v674 = vld [vmem:[#allocation13 + $0x2c] sm:$0xf]
    %v675 = vld [vmem:[#allocation13 + $0x30] sm:$0xf]
    %v676 = vld [vmem:[#allocation13 + $0x34] sm:$0xf]
    %v677 = vld [vmem:[#allocation13 + $0x38] sm:$0xf]
    %v678 = vld [vmem:[#allocation13 + $0x3c] sm:$0xf]
    %v679 = vld [vmem:[%s10] sm:$0x1]
    %v681 = vperm.slane %v679, 0
    %v699 = vunpack.c.l.b16 %v663
    %v700 = vunpack.c.l.b16 %v664
    %v701 = vunpack.c.l.b16 %v665
    %v702 = vunpack.c.l.b16 %v666
    %v703 = vunpack.c.l.b16 %v667
    %v704 = vunpack.c.l.b16 %v668
    %v705 = vunpack.c.l.b16 %v669
    %v706 = vunpack.c.l.b16 %v670
    %v707 = vunpack.c.l.b16 %v671
    %v708 = vunpack.c.l.b16 %v672
    %v709 = vunpack.c.l.b16 %v673
    %v710 = vunpack.c.l.b16 %v674
    %v711 = vunpack.c.l.b16 %v675
    %v712 = vunpack.c.l.b16 %v676
    %v713 = vunpack.c.l.b16 %v677
    %v714 = vunpack.c.l.b16 %v678
    %v715 = vpack.c.b16 %v700, %v699
    %v716 = vpack.c.b16 %v702, %v701
    %v717 = vpack.c.b16 %v704, %v703
    %v718 = vpack.c.b16 %v706, %v705
    %v719 = vpack.c.b16 %v708, %v707
    %v720 = vpack.c.b16 %v710, %v709
    %v721 = vpack.c.b16 %v712, %v711
    %v722 = vpack.c.b16 %v714, %v713
    %731 = vmatpush.bf16.msra.mxu0 %v722
    %732 = vmatpush.bf16.msra.mxu0 %v721
    %733 = vmatpush.bf16.msra.mxu0 %v720
    %734 = vmatpush.bf16.msra.mxu0 %v719
    %735 = vmatpush.bf16.msra.mxu0 %v718
    %736 = vmatpush.bf16.msra.mxu0 %v717
    %737 = vmatpush.bf16.msra.mxu0 %v716
    %738 = vmatpush.bf16.msra.mxu0 %v715
    %739 = vmatmul.bf16.gmra.mxu0 %v662
    %v740 = vpop.f32.mrf.mxu0
    %v741 = vadd.f32 %v681, %v740
    %v742 = vpop.f32.mrf.mxu0
    %743 = vdwg.mxu0
    %744 = vmax.xlane.f32.xlu0 %v741
    %v745 = vpop.xlane.xlu0 %744
    %v746 = vsub.f32 %v741, %v745
    %v747 = vmul.f32 %v746, 1.442695
    %v748 = vpow.pop %v747
    %749 = vadd.xlane.f32.xlu0 %v748
    %v750 = vpop.xlane.xlu0 %749
    %v751 = vrcp.pop %v750
    %v752 = vmul.f32 %v748, %v751
    %753 = vst [vmem:[#allocation14] sm:$0xff] %v752
    // Predicated region
    $region74: #{tpu_custom_call.1} parent=1 // pred_check
      _
    $region75: #{tpu_custom_call.1} parent=1 // pred_check_branch
      %755 = sbr.rel (0) target = $region77
    $region76: #{tpu_custom_call.1} parent=1 // pred_region
      %757 = vsyncadd [#allocation4], 0
      %s759 = sshll.u32 [#allocation14], 4
      %s760 = int_to_ptr.vmem [resolvable:$true] %s759
      %s761 = sshll.u32 %s11, 4
      %s762 = int_to_ptr.hbm [resolvable:$true] %s761
      %764 = dma.vmem_to_hbm [thread:$0]  %s760, 128, %s762, [#allocation4]
    $region77: #{tpu_custom_call.1} parent=1 // pred_fallthru
      _
    // Predicated region
    $region78: #{tpu_custom_call.1} parent=1 // pred_check
      _
    $region79: #{tpu_custom_call.1} parent=1 // pred_check_branch
      %766 = sbr.rel (0) target = $region81
    $region80: #{tpu_custom_call.1} parent=1 // pred_region
      %768 = dma.done [#allocation4], 128
    $region81: #{tpu_custom_call.1} parent=1 // pred_fallthru
      _
    %769 = vsyncpa [#allocation3], 1
    %770 = vsyncpa [#allocation6], 1
    %771 = vsyncpa [#allocation9], 1
    %772 = vsyncpa [#allocation12], 1
    %773 = vsyncpa [#allocation4], 1

</llo_original>
